<compile_context>
chip_gen: v6e
topology: v6e:2x2x1
jax: 0.10.0
libtpu: 0.0.40
codegen_flags: <defaults>
</compile_context>

<pallas_src>
import math

import jax
import jax.numpy as jnp
from jax.experimental import pallas as pl
from jax.experimental.pallas import tpu as pltpu


# ---------------------------------------------------------------------------
# forward() materialized: identity read-out of the parameter as HBM->HBM DMA.
# ---------------------------------------------------------------------------
_DMA_TARGET_CHUNK_BYTES = 4 * 1024 * 1024   # ~4 MiB per DMA descriptor
_MAX_DMA_CHUNKS = 8                         # cap on outstanding DMAs
_PALLAS_COPY_MIN_BYTES = 256 * 1024         # below this, plain XLA copy wins


def _nbytes(shape, dtype) -> int:
    return math.prod(shape) * jnp.dtype(dtype).itemsize if shape else jnp.dtype(dtype).itemsize


def _num_dma_chunks(shape, dtype) -> int:
    """How many disjoint leading-axis DMAs to issue (static, from shape only)."""
    if not shape:
        return 1
    want = min(_MAX_DMA_CHUNKS, max(1, pl.cdiv(_nbytes(shape, dtype), _DMA_TARGET_CHUNK_BYTES)))
    return max(1, min(want, shape[0]))


def _make_chunked_copy_kernel(shape, n_chunks):
    """Kernel issuing n_chunks disjoint HBM->HBM DMAs, then waiting on all."""
    if not shape or n_chunks <= 1:
        def kernel(w_hbm, o_hbm, sem):
            cp = pltpu.make_async_copy(w_hbm, o_hbm, sem.at[0])
            cp.start()
            cp.wait()
        return kernel

    dim0 = shape[0]
    base, rem = divmod(dim0, n_chunks)
    sizes = [base + (1 if i < rem else 0) for i in range(n_chunks)]
    starts = [sum(sizes[:i]) for i in range(n_chunks)]

    def kernel(w_hbm, o_hbm, sem):
        copies = []
        # Start all DMAs first (multiple outstanding descriptors), then wait.
        for i in range(n_chunks):
            cp = pltpu.make_async_copy(
                w_hbm.at[pl.ds(starts[i], sizes[i])],
                o_hbm.at[pl.ds(starts[i], sizes[i])],
                sem.at[i],
            )
            cp.start()
            copies.append(cp)
        for cp in copies:
            cp.wait()

    return kernel


@jax.jit
def _pallas_copy(weight: jax.Array) -> jax.Array:
    n_chunks = _num_dma_chunks(weight.shape, weight.dtype)
    nbytes = _nbytes(weight.shape, weight.dtype)
    return pl.pallas_call(
        _make_chunked_copy_kernel(weight.shape, n_chunks),
        in_specs=[pl.BlockSpec(memory_space=pl.ANY)],
        out_specs=pl.BlockSpec(memory_space=pl.ANY),
        out_shape=jax.ShapeDtypeStruct(weight.shape, weight.dtype),
        scratch_shapes=[pltpu.SemaphoreType.DMA((n_chunks,))],
        cost_estimate=pl.CostEstimate(
            flops=0, transcendentals=0, bytes_accessed=2 * nbytes),
    )(weight)


_xla_copy = jax.jit(lambda w: jnp.copy(w))


def synthesised_image_forward(weight: jax.Array, *, force_pallas: bool = False) -> jax.Array:
    """Materialized SynthesisedImage.forward(): a fresh copy of `weight`.

    Tiny weights skip the custom-call boundary (launch overhead dominates the
    <0.1 us copy) unless force_pallas=True.
    """
    if not force_pallas and _nbytes(weight.shape, weight.dtype) < _PALLAS_COPY_MIN_BYTES:
        return _xla_copy(weight)
    return _pallas_copy(weight)


# ---------------------------------------------------------------------------
# __init__: torch.rand(image_shape) -> U[0, 1) float32.
# ---------------------------------------------------------------------------
def uniform_init(image_shape, key) -> jax.Array:
    # One-time init cost; kept in XLA for portability (see TODO above).
    return jax.random.uniform(key, image_shape, dtype=jnp.float32)


# ---------------------------------------------------------------------------
# Module wrapper
# ---------------------------------------------------------------------------
class SynthesisedImage:
    """JAX/Pallas port of the PyTorch SynthesisedImage module (NCHW weight)."""

    def __init__(self, image_shape, *, key):
        self.weight = uniform_init(image_shape, key)

    def __call__(self, *, materialize: bool = False, force_pallas: bool = False):
        # Default mirrors torch exactly: forward() is `return self.weight`
        # (identity, zero HBM traffic).  materialize=True returns a fresh
        # buffer via the HBM->HBM DMA kernel (or a cheap XLA copy when tiny).
        if not materialize:
            return self.weight
        return synthesised_image_forward(self.weight, force_pallas=force_pallas)


if __name__ == "__main__":
    key = jax.random.PRNGKey(0)
    image_shape = (2, 4, 16, 16)  # small NCHW: batch=2, channels=4, 16x16

    model = SynthesisedImage(image_shape, key=key)

    # Run the Pallas DMA-copy kernel once and block on it.
    out = jax.block_until_ready(model(materialize=True, force_pallas=True))

    free = model()                       # default zero-copy identity path
    small = model(materialize=True)      # tiny weight -> XLA-copy bypass path

    # Forward must return the parameter exactly.
    assert out.shape == image_shape
    assert out.dtype == jnp.float32
    assert jnp.array_equal(out, model.weight)
    assert free is model.weight
    assert small.shape == image_shape and jnp.array_equal(small, model.weight)
    # Initialization matches torch.rand support: U[0, 1).
    assert bool(jnp.all((model.weight >= 0.0) & (model.weight < 1.0)))

    print("KERNEL_OK")
</pallas_src>

<mosaic_0001>
module attributes {stable_mosaic.version = 11 : i64} {
  func.func @kernel(%arg0: memref<2x4x16x16xf32, #tpu.memory_space<any>>, %arg1: memref<2x4x16x16xf32, #tpu.memory_space<any>>, %arg2: memref<1x!tpu.dma_semaphore, #tpu.memory_space<semaphore_mem>>) attributes {dimension_semantics = [], scalar_prefetch = 0 : i64, scratch_operands = 1 : i64, tpu.core_type = #tpu.core_type<tc>} {
    %c0_i32 = arith.constant 0 : i32
    %0 = tpu.memref_slice %arg2[%c0_i32] : memref<1x!tpu.dma_semaphore, #tpu.memory_space<semaphore_mem>> -> memref<1x!tpu.dma_semaphore, #tpu.memory_space<semaphore_mem>>
    %1 = tpu.memref_squeeze %0 : memref<1x!tpu.dma_semaphore, #tpu.memory_space<semaphore_mem>> -> memref<!tpu.dma_semaphore, #tpu.memory_space<semaphore_mem>>
    tpu.enqueue_dma source(%arg0 : memref<2x4x16x16xf32, #tpu.memory_space<any>>) target(%arg1 : memref<2x4x16x16xf32, #tpu.memory_space<any>>) target_semaphore(%1 : memref<!tpu.dma_semaphore, #tpu.memory_space<semaphore_mem>>)
    %c0_i32_0 = arith.constant 0 : i32
    %2 = tpu.memref_slice %arg2[%c0_i32_0] : memref<1x!tpu.dma_semaphore, #tpu.memory_space<semaphore_mem>> -> memref<1x!tpu.dma_semaphore, #tpu.memory_space<semaphore_mem>>
    %3 = tpu.memref_squeeze %2 : memref<1x!tpu.dma_semaphore, #tpu.memory_space<semaphore_mem>> -> memref<!tpu.dma_semaphore, #tpu.memory_space<semaphore_mem>>
    tpu.wait_dma2 semaphore(%3 : memref<!tpu.dma_semaphore, #tpu.memory_space<semaphore_mem>>) src(%arg0 : memref<2x4x16x16xf32, #tpu.memory_space<any>>) dst(%arg1 : memref<2x4x16x16xf32, #tpu.memory_space<any>>)
    return
  }
}

</mosaic_0001>

<llo_original>
// kernel: _pallas_copy.1
$region0: #{_pallas_copy.1}
  #allocation0 [shape = 'u32[]', space=smem, size = 0x4, offset = 0x4, fixed_abs, tag = 'smem constant byte address 0x4 - core index']
  #allocation1 [shape = 'u32[144,128]{1,0:T(1,128)}', space=vmem, size = 0x12000, scoped, tag = 'internal scratch']
  #allocation2 [shape = 's32[1]{0}', space=sflag, size = 0x4, scoped, tag = 'scratch operand']
  #allocation3 [shape = 's32[]', space=sflag, size = 0x4, offset = 0, fixed_abs, tag = 'sflag constant byte address 0x0 - dummy sync flag']
  #allocation4 [shape = 'u32[0]{0}', space=smem, size = 0, offset = 0, fixed_abs, tag = 'smem constant byte address 0x0 - null']
  %s0 = inlined_call_operand.hbm [shape: f32[2,4,16,16], index: 0, kind: input, shape index: {}]
  %s1 = inlined_call_operand.hbm [shape: f32[2,4,16,16], index: 1, kind: output, shape index: {}]
  %s2 = sld [smem:[#allocation0]]
  $region2: #{_pallas_copy.1} parent=0
    _
  %s4 = ssub.s32 1, %s2
  %s5 = scalar_select 0, %s4, %s2
  %s7 = sshll.u32 1, 14
  %s8 = sxor.u32 4294967295, %s7
  %12 = dma.general %s0, 2048, %s1, [#allocation2], 131072, [#allocation4], 0, 0
  %s13 = smul.u32 2, 4
  %s14 = smul.u32 %s13, 16
  %s15 = smul.u32 %s14, 1
  %s16 = sshll.u32 %s15, 4
  %17 = dma.done [#allocation2], %s16
  %18 = vsyncmov [#allocation2]
  %s19 = vpop.sfrf %18
  %p20 = scmp.eq.s32.totalorder %s19, 0
  %p21 = pneg %p20
  %23 = shalt.err (%p21)

</llo_original>
